<compile_context>
chip_gen: v7x
topology: tpu7x:2x2x1
jax: 0.10.0
libtpu: 0.0.40
codegen_flags: <defaults>
</compile_context>

<pallas_src>
import jax
import jax.numpy as jnp
from jax.experimental import pallas as pl
from jax.experimental.pallas import tpu as pltpu

INPUT_SIZE = 10
LAYER_SIZE = 15
OUTPUT_SIZE = 5
MAX_TILE_BATCH = 4096   # rows per grid step (multiple of 8)


def _round_up(n, m):
    return ((n + m - 1) // m) * m


def mlp_kernel(x_ref, w1_ref, b1_ref, w2_ref, b2_ref, o_ref):
    # layer1: x @ W1 + b1, ReLU
    h = jnp.dot(
        x_ref[...], w1_ref[...],
        preferred_element_type=jnp.float32,
        precision=jax.lax.Precision.HIGHEST,
    )
    h = jnp.maximum(h + b1_ref[...], 0.0)           # (tb, 15), bias broadcasts
    # layer2: h @ W2 + b2 -> narrow (tb, 5) store (masked vst is hidden under DMA)
    out = jnp.dot(
        h, w2_ref[...],
        preferred_element_type=jnp.float32,
        precision=jax.lax.Precision.HIGHEST,
    )
    o_ref[...] = (out + b2_ref[...]).astype(o_ref.dtype)


def neural_network_forward(x, w1, b1, w2, b2, *, tile_batch=MAX_TILE_BATCH):
    """x: (B, 10) f32; w1: (10, 15); b1: (15,); w2: (15, 5); b2: (5,) -> (B, 5)."""
    B = x.shape[0]

    # Tile size: multiple of 8 (f32 sublane), capped, and chosen so the grid
    # has >=2 steps when possible (v7x has 2 TensorCores to shard the batch
    # axis across; no-op on v5e/v6e).
    tile_cap = max(8, (int(tile_batch) // 8) * 8)
    tb = min(tile_cap, _round_up(pl.cdiv(max(B, 1), 2), 8))
    grid = (pl.cdiv(B, tb),)

    b1_2d = b1.reshape(1, LAYER_SIZE)
    b2_2d = b2.reshape(1, OUTPUT_SIZE)

    flops = 2 * B * (INPUT_SIZE * LAYER_SIZE + LAYER_SIZE * OUTPUT_SIZE)
    bytes_accessed = (
        B * (INPUT_SIZE + OUTPUT_SIZE) * 4
        + (INPUT_SIZE * LAYER_SIZE + LAYER_SIZE
           + LAYER_SIZE * OUTPUT_SIZE + OUTPUT_SIZE) * 4
    )

    out = pl.pallas_call(
        mlp_kernel,
        out_shape=jax.ShapeDtypeStruct((B, OUTPUT_SIZE), x.dtype),
        grid=grid,
        in_specs=[
            # batch-tiled input (ragged last block is clipped by Pallas)
            pl.BlockSpec((tb, INPUT_SIZE), lambda i: (i, 0)),
            # weights / biases: constant block index -> VMEM-resident, fetched once
            pl.BlockSpec((INPUT_SIZE, LAYER_SIZE), lambda i: (0, 0)),
            pl.BlockSpec((1, LAYER_SIZE), lambda i: (0, 0)),
            pl.BlockSpec((LAYER_SIZE, OUTPUT_SIZE), lambda i: (0, 0)),
            pl.BlockSpec((1, OUTPUT_SIZE), lambda i: (0, 0)),
        ],
        out_specs=pl.BlockSpec((tb, OUTPUT_SIZE), lambda i: (i, 0)),
        compiler_params=pltpu.CompilerParams(
            dimension_semantics=("parallel",),      # megacore batch sharding on v7x
        ),
        cost_estimate=pl.CostEstimate(
            flops=flops, transcendentals=0, bytes_accessed=bytes_accessed
        ),
    )(x, w1, b1_2d, w2, b2_2d)

    return out


def init_params(key):
    """Mimic PyTorch nn.Linear default init: U(-1/sqrt(fan_in), 1/sqrt(fan_in))."""
    k1, k2, k3, k4 = jax.random.split(key, 4)
    bound1 = 1.0 / jnp.sqrt(INPUT_SIZE)
    bound2 = 1.0 / jnp.sqrt(LAYER_SIZE)
    # Stored as (in, out) so the kernel computes x @ W directly.
    w1 = jax.random.uniform(k1, (INPUT_SIZE, LAYER_SIZE), jnp.float32, -bound1, bound1)
    b1 = jax.random.uniform(k2, (LAYER_SIZE,), jnp.float32, -bound1, bound1)
    w2 = jax.random.uniform(k3, (LAYER_SIZE, OUTPUT_SIZE), jnp.float32, -bound2, bound2)
    b2 = jax.random.uniform(k4, (OUTPUT_SIZE,), jnp.float32, -bound2, bound2)
    return w1, b1, w2, b2


def _reference(x, w1, b1, w2, b2):
    hi = jax.lax.Precision.HIGHEST
    h = jnp.maximum(jnp.dot(x, w1, precision=hi) + b1, 0.0)
    return jnp.dot(h, w2, precision=hi) + b2


if __name__ == "__main__":
    key = jax.random.PRNGKey(0)
    k_params, k_x1, k_x2, k_x3 = jax.random.split(key, 4)
    w1, b1, w2, b2 = init_params(k_params)

    # Small batch (single exact tile).
    batch = 8
    x = jax.random.normal(k_x1, (batch, INPUT_SIZE), jnp.float32)
    out = jax.block_until_ready(neural_network_forward(x, w1, b1, w2, b2))
    ref = _reference(x, w1, b1, w2, b2)
    assert out.shape == (batch, OUTPUT_SIZE)
    assert jnp.allclose(out, ref, atol=1e-5, rtol=1e-5)

    # Non-multiple-of-8 batch: exercises the ragged last block (no jnp.pad).
    batch2 = 13
    x2 = jax.random.normal(k_x2, (batch2, INPUT_SIZE), jnp.float32)
    out2 = jax.block_until_ready(neural_network_forward(x2, w1, b1, w2, b2))
    ref2 = _reference(x2, w1, b1, w2, b2)
    assert out2.shape == (batch2, OUTPUT_SIZE)
    assert jnp.allclose(out2, ref2, atol=1e-5, rtol=1e-5)

    # Multi-step grid path (several batch tiles).
    batch3 = 40
    x3 = jax.random.normal(k_x3, (batch3, INPUT_SIZE), jnp.float32)
    out3 = jax.block_until_ready(
        neural_network_forward(x3, w1, b1, w2, b2, tile_batch=16)
    )
    ref3 = _reference(x3, w1, b1, w2, b2)
    assert out3.shape == (batch3, OUTPUT_SIZE)
    assert jnp.allclose(out3, ref3, atol=1e-5, rtol=1e-5)

    print("KERNEL_OK")
</pallas_src>

<mosaic_0001>
module attributes {stable_mosaic.version = 11 : i64} {
  func.func @mlp_kernel(%arg0: i32, %arg1: memref<8x10xf32, #tpu.memory_space<vmem>>, %arg2: memref<10x15xf32, #tpu.memory_space<vmem>>, %arg3: memref<1x15xf32, #tpu.memory_space<vmem>>, %arg4: memref<15x5xf32, #tpu.memory_space<vmem>>, %arg5: memref<1x5xf32, #tpu.memory_space<vmem>>, %arg6: memref<8x5xf32, #tpu.memory_space<vmem>>) attributes {dimension_semantics = [#tpu.dimension_semantics<parallel>], iteration_bounds = array<i64: 1>, scalar_prefetch = 0 : i64, scratch_operands = 0 : i64, tpu.core_type = #tpu.core_type<tc>, window_params = [{transform_indices = @transform_0, window_bounds = array<i64: 8, 10>}, {pipeline_mode = #tpu.pipeline_mode<synchronous>, transform_indices = @transform_1, window_bounds = array<i64: 10, 15>}, {pipeline_mode = #tpu.pipeline_mode<synchronous>, transform_indices = @transform_2, window_bounds = array<i64: 1, 15>}, {pipeline_mode = #tpu.pipeline_mode<synchronous>, transform_indices = @transform_3, window_bounds = array<i64: 15, 5>}, {pipeline_mode = #tpu.pipeline_mode<synchronous>, transform_indices = @transform_4, window_bounds = array<i64: 1, 5>}, {transform_indices = @transform_5, window_bounds = array<i64: 8, 5>}]} {
    %c0 = arith.constant 0 : index
    %c0_0 = arith.constant 0 : index
    %0 = vector.load %arg1[%c0, %c0_0] : memref<8x10xf32, #tpu.memory_space<vmem>>, vector<8x10xf32>
    %c0_1 = arith.constant 0 : index
    %c0_2 = arith.constant 0 : index
    %1 = vector.load %arg2[%c0_1, %c0_2] : memref<10x15xf32, #tpu.memory_space<vmem>>, vector<10x15xf32>
    %cst = arith.constant dense<0.000000e+00> : vector<8x15xf32>
    %2 = tpu.matmul %0, %1, %cst {dimension_numbers = #tpu.dot_dimension_numbers<[1], [0], [0], [1], [0, 0, 1, 1], [], []>, precision = #tpu.contract_precision<fp32>} : vector<8x10xf32>, vector<10x15xf32>, vector<8x15xf32> -> vector<8x15xf32>
    %c0_3 = arith.constant 0 : index
    %c0_4 = arith.constant 0 : index
    %3 = vector.load %arg3[%c0_3, %c0_4] : memref<1x15xf32, #tpu.memory_space<vmem>>, vector<1x15xf32>
    %4 = vector.broadcast %3 : vector<1x15xf32> to vector<8x15xf32>
    %5 = arith.addf %2, %4 : vector<8x15xf32>
    %cst_5 = arith.constant 0.000000e+00 : f32
    %6 = vector.broadcast %cst_5 : f32 to vector<8x15xf32>
    %7 = arith.maximumf %5, %6 : vector<8x15xf32>
    %c0_6 = arith.constant 0 : index
    %c0_7 = arith.constant 0 : index
    %8 = vector.load %arg4[%c0_6, %c0_7] : memref<15x5xf32, #tpu.memory_space<vmem>>, vector<15x5xf32>
    %cst_8 = arith.constant dense<0.000000e+00> : vector<8x5xf32>
    %9 = tpu.matmul %7, %8, %cst_8 {dimension_numbers = #tpu.dot_dimension_numbers<[1], [0], [0], [1], [0, 0, 1, 1], [], []>, precision = #tpu.contract_precision<fp32>} : vector<8x15xf32>, vector<15x5xf32>, vector<8x5xf32> -> vector<8x5xf32>
    %c0_9 = arith.constant 0 : index
    %c0_10 = arith.constant 0 : index
    %10 = vector.load %arg5[%c0_9, %c0_10] : memref<1x5xf32, #tpu.memory_space<vmem>>, vector<1x5xf32>
    %11 = vector.broadcast %10 : vector<1x5xf32> to vector<8x5xf32>
    %12 = arith.addf %9, %11 : vector<8x5xf32>
    %c0_11 = arith.constant 0 : index
    %c0_12 = arith.constant 0 : index
    %13 = vector.load %arg6[%c0_11, %c0_12] : memref<8x5xf32, #tpu.memory_space<vmem>>, vector<8x5xf32>
    tpu.vector_store %arg6[%c0_11, %c0_12], %12 {strides = array<i32>} : memref<8x5xf32, #tpu.memory_space<vmem>>, vector<8x5xf32>,
    return
  }
  func.func @transform_0(%arg0: i32) -> (i32, i32) {
    %c0_i32 = arith.constant 0 : i32
    %c0_i32_0 = arith.constant 0 : i32
    return %arg0, %c0_i32 : i32, i32
  }
  func.func @transform_1(%arg0: i32) -> (i32, i32) {
    %c0_i32 = arith.constant 0 : i32
    %c0_i32_0 = arith.constant 0 : i32
    %c0_i32_1 = arith.constant 0 : i32
    return %c0_i32, %c0_i32_0 : i32, i32
  }
  func.func @transform_2(%arg0: i32) -> (i32, i32) {
    %c0_i32 = arith.constant 0 : i32
    %c0_i32_0 = arith.constant 0 : i32
    %c0_i32_1 = arith.constant 0 : i32
    return %c0_i32, %c0_i32_0 : i32, i32
  }
  func.func @transform_3(%arg0: i32) -> (i32, i32) {
    %c0_i32 = arith.constant 0 : i32
    %c0_i32_0 = arith.constant 0 : i32
    %c0_i32_1 = arith.constant 0 : i32
    return %c0_i32, %c0_i32_0 : i32, i32
  }
  func.func @transform_4(%arg0: i32) -> (i32, i32) {
    %c0_i32 = arith.constant 0 : i32
    %c0_i32_0 = arith.constant 0 : i32
    %c0_i32_1 = arith.constant 0 : i32
    return %c0_i32, %c0_i32_0 : i32, i32
  }
  func.func @transform_5(%arg0: i32) -> (i32, i32) {
    %c0_i32 = arith.constant 0 : i32
    %c0_i32_0 = arith.constant 0 : i32
    return %arg0, %c0_i32 : i32, i32
  }
}

</mosaic_0001>

<llo_original>
// kernel: tpu_custom_call.1
$region0: #{tpu_custom_call.1}
  #allocation0 [shape = 'u32[]', space=smem, size = 0x4, offset = 0x4, fixed_abs, tag = 'smem constant byte address 0x4 - core index']
  #allocation1 [shape = 'u32[144,128]{1,0:T(1,128)}', space=vmem, size = 0x12000, scoped, tag = 'internal scratch']
  %s0 = inlined_call_operand.vmem [shape: f32[8,10], index: 0, kind: input, shape index: {}]
  %s1 = inlined_call_operand.vmem [shape: f32[10,15], index: 1, kind: input, shape index: {}]
  %s2 = inlined_call_operand.vmem [shape: f32[1,15], index: 2, kind: input, shape index: {}]
  %s3 = inlined_call_operand.vmem [shape: f32[15,5], index: 3, kind: input, shape index: {}]
  %s4 = inlined_call_operand.vmem [shape: f32[1,5], index: 4, kind: input, shape index: {}]
  %s5 = inlined_call_operand.hbm [shape: f32[8,5], index: 5, kind: output, shape index: {}]
  %s6 = sld [smem:[#allocation0]]
  $region30: #{tpu_custom_call.1} parent=0
    _
  %s8 = ssub.s32 1, %s6
  %s9 = scalar_select 0, %s8, %s6
  $region1: #{tpu_custom_call.1} parent=0
    #allocation2 [shape = 'u8[4096]{0}', space=vmem, size = 0x1000, scoped, tag = 'output window, operand 0, single buffered']
    #allocation3 [shape = 's32[1]{0}', space=sflag, size = 0x4, scoped, tag = 'scoped memory for tpu_custom_call.1']
    %10 = vsyncpa [#allocation3], 0
    // Predicated region
    $region2: #{tpu_custom_call.1} parent=1 // pred_check
      _
    $region3: #{tpu_custom_call.1} parent=1 // pred_check_branch
      %12 = sbr.rel (0) target = $region5
    $region4: #{tpu_custom_call.1} parent=1 // pred_region
      _
    $region5: #{tpu_custom_call.1} parent=1 // pred_fallthru
      _
    // Predicated region
    $region6: #{tpu_custom_call.1} parent=1 // pred_check
      _
    $region7: #{tpu_custom_call.1} parent=1 // pred_check_branch
      %14 = sbr.rel (0) target = $region9
    $region8: #{tpu_custom_call.1} parent=1 // pred_region
      _
    $region9: #{tpu_custom_call.1} parent=1 // pred_fallthru
      _
    // Predicated region
    $region10: #{tpu_custom_call.1} parent=1 // pred_check
      _
    $region11: #{tpu_custom_call.1} parent=1 // pred_check_branch
      %16 = sbr.rel (0) target = $region13
    $region12: #{tpu_custom_call.1} parent=1 // pred_region
      _
    $region13: #{tpu_custom_call.1} parent=1 // pred_fallthru
      _
    // Predicated region
    $region14: #{tpu_custom_call.1} parent=1 // pred_check
      _
    $region15: #{tpu_custom_call.1} parent=1 // pred_check_branch
      %18 = sbr.rel (0) target = $region17
    $region16: #{tpu_custom_call.1} parent=1 // pred_region
      _
    $region17: #{tpu_custom_call.1} parent=1 // pred_fallthru
      _
    // Predicated region
    $region18: #{tpu_custom_call.1} parent=1 // pred_check
      _
    $region19: #{tpu_custom_call.1} parent=1 // pred_check_branch
      %20 = sbr.rel (0) target = $region21
    $region20: #{tpu_custom_call.1} parent=1 // pred_region
      _
    $region21: #{tpu_custom_call.1} parent=1 // pred_fallthru
      _
    %v21 = vld [vmem:[%s0] sm:$0xff]
    %v22 = vld [vmem:[%s1] sm:$0xff]
    %v23 = vld [vmem:[%s1 + $0x8] sm:$0x3]
    %v24 = vld [vmem:[%s2] sm:$0x1]
    %v26 = vlaneseq
    %v27 = vshrl.u32 %v26, 7
    %v28 = vsub.s32 0, %v27
    %v29 = vrot.slane %v24, %v28
    %vm31 = vcmask 80896
    %v33 = vsel %vm31, %v21, 0
    %vm35 = vcmask 1041408
    %v37 = vsel %vm35, %v23, 0
    %39 = vmatprep.subr.mxu0 0.0
    %v40 = vand.u32 %v22, 4294901760
    %41 = vmatpush1.msra.mxu0 %v40
    %42 = vmatprep.subr.mxu0 0.0
    %v43 = vand.u32 %v37, 4294901760
    %44 = vmatpush1.msra.mxu0 %v43
    %45 = vmatprep.subr.mxu0 0.0
    %46 = vmatpush1.msra.mxu0 0.0
    %47 = vmatprep.subr.mxu0 0.0
    %48 = vmatpush1.msra.mxu0 0.0
    %49 = vmatprep.subr.mxu0 0.0
    %50 = vmatpush1.msra.mxu0 0.0
    %51 = vmatprep.subr.mxu0 0.0
    %52 = vmatpush1.msra.mxu0 0.0
    %53 = vmatprep.subr.mxu0 0.0
    %54 = vmatpush1.msra.mxu0 0.0
    %55 = vmatprep.subr.mxu0 0.0
    %56 = vmatpush1.msra.mxu0 0.0
    %57 = vmatprep.subr.mxu0 0.0
    %58 = vmatpush1.msra.mxu0 0.0
    %59 = vmatprep.subr.mxu0 0.0
    %60 = vmatpush1.msra.mxu0 0.0
    %61 = vmatprep.subr.mxu0 0.0
    %62 = vmatpush1.msra.mxu0 0.0
    %63 = vmatprep.subr.mxu0 0.0
    %64 = vmatpush1.msra.mxu0 0.0
    %65 = vmatprep.subr.mxu0 0.0
    %66 = vmatpush1.msra.mxu0 0.0
    %67 = vmatprep.subr.mxu0 0.0
    %68 = vmatpush1.msra.mxu0 0.0
    %69 = vmatprep.subr.mxu0 0.0
    %70 = vmatpush1.msra.mxu0 0.0
    %71 = vmatprep.subr.mxu0 0.0
    %72 = vmatpush1.msra.mxu0 0.0
    %73 = vmatprep.subr.mxu0 0.0
    %74 = vmatpush1.msra.mxu0 0.0
    %75 = vmatprep.subr.mxu0 0.0
    %76 = vmatpush1.msra.mxu0 0.0
    %77 = vmatprep.subr.mxu0 0.0
    %78 = vmatpush1.msra.mxu0 0.0
    %79 = vmatprep.subr.mxu0 0.0
    %80 = vmatpush1.msra.mxu0 0.0
    %81 = vmatprep.subr.mxu0 0.0
    %82 = vmatpush1.msra.mxu0 0.0
    %83 = vmatprep.subr.mxu0 0.0
    %84 = vmatpush1.msra.mxu0 0.0
    %85 = vmatprep.subr.mxu0 0.0
    %86 = vmatpush1.msra.mxu0 0.0
    %87 = vmatprep.subr.mxu0 0.0
    %88 = vmatpush1.msra.mxu0 0.0
    %89 = vmatprep.subr.mxu0 0.0
    %90 = vmatpush1.msra.mxu0 0.0
    %91 = vmatprep.subr.mxu0 0.0
    %92 = vmatpush1.msra.mxu0 0.0
    %93 = vmatprep.subr.mxu0 0.0
    %94 = vmatpush1.msra.mxu0 0.0
    %95 = vmatprep.subr.mxu0 0.0
    %96 = vmatpush1.msra.mxu0 0.0
    %97 = vmatprep.subr.mxu0 0.0
    %98 = vmatpush1.msra.mxu0 0.0
    %99 = vmatprep.subr.mxu0 0.0
    %100 = vmatpush1.msra.mxu0 0.0
    %101 = vmatprep.subr.mxu0 0.0
    %102 = vmatpush1.msra.mxu0 0.0
    %103 = vmatprep.subr.mxu0 0.0
    %104 = vmatpush1.msra.mxu0 0.0
    %105 = vmatprep.mubr.f32.mxu0 0.0
    %v106 = vand.u32 %v33, 4294901760
    %v107 = vsub.f32 %v33, %v106
    %v108 = vand.u32 %v107, 4294901760
    %v109 = vsub.f32 %v107, %v108
    %v110 = vand.u32 %v109, 4294901760
    %111 = vmatmul.mubr.f32.gmra.mrb[0].mxu0 %v110
    %v112 = vpop.f32.mrb[0].mxu0
    %v113 = vadd.f32 %v29, %v112
    %v114 = vpop.f32.mrb[0].mxu0
    %115 = vdwg.mxu0
    %116 = vmatprep.subr.mxu0 0.0
    %v117 = vand.u32 %v22, 4294901760
    %v118 = vsub.f32 %v22, %v117
    %v119 = vand.u32 %v118, 4294901760
    %v120 = vsub.f32 %v118, %v119
    %v121 = vand.u32 %v120, 4294901760
    %122 = vmatpush1.msra.mxu0 %v121
    %123 = vmatprep.subr.mxu0 0.0
    %v124 = vand.u32 %v37, 4294901760
    %v125 = vsub.f32 %v37, %v124
    %v126 = vand.u32 %v125, 4294901760
    %v127 = vsub.f32 %v125, %v126
    %v128 = vand.u32 %v127, 4294901760
    %129 = vmatpush1.msra.mxu0 %v128
    %130 = vmatprep.subr.mxu0 0.0
    %131 = vmatpush1.msra.mxu0 0.0
    %132 = vmatprep.subr.mxu0 0.0
    %133 = vmatpush1.msra.mxu0 0.0
    %134 = vmatprep.subr.mxu0 0.0
    %135 = vmatpush1.msra.mxu0 0.0
    %136 = vmatprep.subr.mxu0 0.0
    %137 = vmatpush1.msra.mxu0 0.0
    %138 = vmatprep.subr.mxu0 0.0
    %139 = vmatpush1.msra.mxu0 0.0
    %140 = vmatprep.subr.mxu0 0.0
    %141 = vmatpush1.msra.mxu0 0.0
    %142 = vmatprep.subr.mxu0 0.0
    %143 = vmatpush1.msra.mxu0 0.0
    %144 = vmatprep.subr.mxu0 0.0
    %145 = vmatpush1.msra.mxu0 0.0
    %146 = vmatprep.subr.mxu0 0.0
    %147 = vmatpush1.msra.mxu0 0.0
    %148 = vmatprep.subr.mxu0 0.0
    %149 = vmatpush1.msra.mxu0 0.0
    %150 = vmatprep.subr.mxu0 0.0
    %151 = vmatpush1.msra.mxu0 0.0
    %152 = vmatprep.subr.mxu0 0.0
    %153 = vmatpush1.msra.mxu0 0.0
    %154 = vmatprep.subr.mxu0 0.0
    %155 = vmatpush1.msra.mxu0 0.0
    %156 = vmatprep.subr.mxu0 0.0
    %157 = vmatpush1.msra.mxu0 0.0
    %158 = vmatprep.subr.mxu0 0.0
    %159 = vmatpush1.msra.mxu0 0.0
    %160 = vmatprep.subr.mxu0 0.0
    %161 = vmatpush1.msra.mxu0 0.0
    %162 = vmatprep.subr.mxu0 0.0
    %163 = vmatpush1.msra.mxu0 0.0
    %164 = vmatprep.subr.mxu0 0.0
    %165 = vmatpush1.msra.mxu0 0.0
    %166 = vmatprep.subr.mxu0 0.0
    %167 = vmatpush1.msra.mxu0 0.0
    %168 = vmatprep.subr.mxu0 0.0
    %169 = vmatpush1.msra.mxu0 0.0
    %170 = vmatprep.subr.mxu0 0.0
    %171 = vmatpush1.msra.mxu0 0.0
    %172 = vmatprep.subr.mxu0 0.0
    %173 = vmatpush1.msra.mxu0 0.0
    %174 = vmatprep.subr.mxu0 0.0
    %175 = vmatpush1.msra.mxu0 0.0
    %176 = vmatprep.subr.mxu0 0.0
    %177 = vmatpush1.msra.mxu0 0.0
    %178 = vmatprep.subr.mxu0 0.0
    %179 = vmatpush1.msra.mxu0 0.0
    %180 = vmatprep.subr.mxu0 0.0
    %181 = vmatpush1.msra.mxu0 0.0
    %182 = vmatprep.subr.mxu0 0.0
    %183 = vmatpush1.msra.mxu0 0.0
    %184 = vmatprep.subr.mxu0 0.0
    %185 = vmatpush1.msra.mxu0 0.0
    %186 = vmatprep.subr.mxu0 0.0
    %187 = vmatpush1.msra.mxu0 0.0
    %188 = vmatprep.subr.mxu0 0.0
    %189 = vmatpush1.msra.mxu0 0.0
    %190 = vmatprep.mubr.f32.mxu0 0.0
    %v191 = vand.u32 %v33, 4294901760
    %192 = vmatmul.mubr.f32.gmra.mrb[0].mxu0 %v191
    %v193 = vpop.f32.mrb[0].mxu0
    %v194 = vadd.f32 %v113, %v193
    %v195 = vpop.f32.mrb[0].mxu0
    %196 = vdwg.mxu0
    %197 = vmatprep.subr.mxu0 0.0
    %v198 = vand.u32 %v22, 4294901760
    %v199 = vsub.f32 %v22, %v198
    %200 = vmatpush1.msra.mxu0 %v199
    %201 = vmatprep.subr.mxu0 0.0
    %v202 = vand.u32 %v37, 4294901760
    %v203 = vsub.f32 %v37, %v202
    %204 = vmatpush1.msra.mxu0 %v203
    %205 = vmatprep.subr.mxu0 0.0
    %206 = vmatpush1.msra.mxu0 0.0
    %207 = vmatprep.subr.mxu0 0.0
    %208 = vmatpush1.msra.mxu0 0.0
    %209 = vmatprep.subr.mxu0 0.0
    %210 = vmatpush1.msra.mxu0 0.0
    %211 = vmatprep.subr.mxu0 0.0
    %212 = vmatpush1.msra.mxu0 0.0
    %213 = vmatprep.subr.mxu0 0.0
    %214 = vmatpush1.msra.mxu0 0.0
    %215 = vmatprep.subr.mxu0 0.0
    %216 = vmatpush1.msra.mxu0 0.0
    %217 = vmatprep.subr.mxu0 0.0
    %218 = vmatpush1.msra.mxu0 0.0
    %219 = vmatprep.subr.mxu0 0.0
    %220 = vmatpush1.msra.mxu0 0.0
    %221 = vmatprep.subr.mxu0 0.0
    %222 = vmatpush1.msra.mxu0 0.0
    %223 = vmatprep.subr.mxu0 0.0
    %224 = vmatpush1.msra.mxu0 0.0
    %225 = vmatprep.subr.mxu0 0.0
    %226 = vmatpush1.msra.mxu0 0.0
    %227 = vmatprep.subr.mxu0 0.0
    %228 = vmatpush1.msra.mxu0 0.0
    %229 = vmatprep.subr.mxu0 0.0
    %230 = vmatpush1.msra.mxu0 0.0
    %231 = vmatprep.subr.mxu0 0.0
    %232 = vmatpush1.msra.mxu0 0.0
    %233 = vmatprep.subr.mxu0 0.0
    %234 = vmatpush1.msra.mxu0 0.0
    %235 = vmatprep.subr.mxu0 0.0
    %236 = vmatpush1.msra.mxu0 0.0
    %237 = vmatprep.subr.mxu0 0.0
    %238 = vmatpush1.msra.mxu0 0.0
    %239 = vmatprep.subr.mxu0 0.0
    %240 = vmatpush1.msra.mxu0 0.0
    %241 = vmatprep.subr.mxu0 0.0
    %242 = vmatpush1.msra.mxu0 0.0
    %243 = vmatprep.subr.mxu0 0.0
    %244 = vmatpush1.msra.mxu0 0.0
    %245 = vmatprep.subr.mxu0 0.0
    %246 = vmatpush1.msra.mxu0 0.0
    %247 = vmatprep.subr.mxu0 0.0
    %248 = vmatpush1.msra.mxu0 0.0
    %249 = vmatprep.subr.mxu0 0.0
    %250 = vmatpush1.msra.mxu0 0.0
    %251 = vmatprep.subr.mxu0 0.0
    %252 = vmatpush1.msra.mxu0 0.0
    %253 = vmatprep.subr.mxu0 0.0
    %254 = vmatpush1.msra.mxu0 0.0
    %255 = vmatprep.subr.mxu0 0.0
    %256 = vmatpush1.msra.mxu0 0.0
    %257 = vmatprep.subr.mxu0 0.0
    %258 = vmatpush1.msra.mxu0 0.0
    %259 = vmatprep.subr.mxu0 0.0
    %260 = vmatpush1.msra.mxu0 0.0
    %261 = vmatprep.subr.mxu0 0.0
    %262 = vmatpush1.msra.mxu0 0.0
    %263 = vmatprep.subr.mxu0 0.0
    %264 = vmatpush1.msra.mxu0 0.0
    %265 = vmatprep.mubr.f32.mxu0 0.0
    %v266 = vand.u32 %v33, 4294901760
    %v267 = vsub.f32 %v33, %v266
    %268 = vmatmul.mubr.f32.gmra.mrb[0].mxu0 %v267
    %v269 = vpop.f32.mrb[0].mxu0
    %v270 = vadd.f32 %v194, %v269
    %v271 = vpop.f32.mrb[0].mxu0
    %272 = vdwg.mxu0
    %273 = vmatprep.subr.mxu0 0.0
    %v274 = vand.u32 %v22, 4294901760
    %275 = vmatpush1.msra.mxu0 %v274
    %276 = vmatprep.subr.mxu0 0.0
    %v277 = vand.u32 %v37, 4294901760
    %278 = vmatpush1.msra.mxu0 %v277
    %279 = vmatprep.subr.mxu0 0.0
    %280 = vmatpush1.msra.mxu0 0.0
    %281 = vmatprep.subr.mxu0 0.0
    %282 = vmatpush1.msra.mxu0 0.0
    %283 = vmatprep.subr.mxu0 0.0
    %284 = vmatpush1.msra.mxu0 0.0
    %285 = vmatprep.subr.mxu0 0.0
    %286 = vmatpush1.msra.mxu0 0.0
    %287 = vmatprep.subr.mxu0 0.0
    %288 = vmatpush1.msra.mxu0 0.0
    %289 = vmatprep.subr.mxu0 0.0
    %290 = vmatpush1.msra.mxu0 0.0
    %291 = vmatprep.subr.mxu0 0.0
    %292 = vmatpush1.msra.mxu0 0.0
    %293 = vmatprep.subr.mxu0 0.0
    %294 = vmatpush1.msra.mxu0 0.0
    %295 = vmatprep.subr.mxu0 0.0
    %296 = vmatpush1.msra.mxu0 0.0
    %297 = vmatprep.subr.mxu0 0.0
    %298 = vmatpush1.msra.mxu0 0.0
    %299 = vmatprep.subr.mxu0 0.0
    %300 = vmatpush1.msra.mxu0 0.0
    %301 = vmatprep.subr.mxu0 0.0
    %302 = vmatpush1.msra.mxu0 0.0
    %303 = vmatprep.subr.mxu0 0.0
    %304 = vmatpush1.msra.mxu0 0.0
    %305 = vmatprep.subr.mxu0 0.0
    %306 = vmatpush1.msra.mxu0 0.0
    %307 = vmatprep.subr.mxu0 0.0
    %308 = vmatpush1.msra.mxu0 0.0
    %309 = vmatprep.subr.mxu0 0.0
    %310 = vmatpush1.msra.mxu0 0.0
    %311 = vmatprep.subr.mxu0 0.0
    %312 = vmatpush1.msra.mxu0 0.0
    %313 = vmatprep.subr.mxu0 0.0
    %314 = vmatpush1.msra.mxu0 0.0
    %315 = vmatprep.subr.mxu0 0.0
    %316 = vmatpush1.msra.mxu0 0.0
    %317 = vmatprep.subr.mxu0 0.0
    %318 = vmatpush1.msra.mxu0 0.0
    %319 = vmatprep.subr.mxu0 0.0
    %320 = vmatpush1.msra.mxu0 0.0
    %321 = vmatprep.subr.mxu0 0.0
    %322 = vmatpush1.msra.mxu0 0.0
    %323 = vmatprep.subr.mxu0 0.0
    %324 = vmatpush1.msra.mxu0 0.0
    %325 = vmatprep.subr.mxu0 0.0
    %326 = vmatpush1.msra.mxu0 0.0
    %327 = vmatprep.subr.mxu0 0.0
    %328 = vmatpush1.msra.mxu0 0.0
    %329 = vmatprep.subr.mxu0 0.0
    %330 = vmatpush1.msra.mxu0 0.0
    %331 = vmatprep.subr.mxu0 0.0
    %332 = vmatpush1.msra.mxu0 0.0
    %333 = vmatprep.subr.mxu0 0.0
    %334 = vmatpush1.msra.mxu0 0.0
    %335 = vmatprep.subr.mxu0 0.0
    %336 = vmatpush1.msra.mxu0 0.0
    %337 = vmatprep.subr.mxu0 0.0
    %338 = vmatpush1.msra.mxu0 0.0
    %339 = vmatprep.mubr.f32.mxu0 0.0
    %v340 = vand.u32 %v33, 4294901760
    %v341 = vsub.f32 %v33, %v340
    %v342 = vand.u32 %v341, 4294901760
    %343 = vmatmul.mubr.f32.gmra.mrb[0].mxu0 %v342
    %v344 = vpop.f32.mrb[0].mxu0
    %v345 = vadd.f32 %v270, %v344
    %v346 = vpop.f32.mrb[0].mxu0
    %347 = vdwg.mxu0
    %348 = vmatprep.subr.mxu0 0.0
    %v349 = vand.u32 %v22, 4294901760
    %v350 = vsub.f32 %v22, %v349
    %v351 = vand.u32 %v350, 4294901760
    %352 = vmatpush1.msra.mxu0 %v351
    %353 = vmatprep.subr.mxu0 0.0
    %v354 = vand.u32 %v37, 4294901760
    %v355 = vsub.f32 %v37, %v354
    %v356 = vand.u32 %v355, 4294901760
    %357 = vmatpush1.msra.mxu0 %v356
    %358 = vmatprep.subr.mxu0 0.0
    %359 = vmatpush1.msra.mxu0 0.0
    %360 = vmatprep.subr.mxu0 0.0
    %361 = vmatpush1.msra.mxu0 0.0
    %362 = vmatprep.subr.mxu0 0.0
    %363 = vmatpush1.msra.mxu0 0.0
    %364 = vmatprep.subr.mxu0 0.0
    %365 = vmatpush1.msra.mxu0 0.0
    %366 = vmatprep.subr.mxu0 0.0
    %367 = vmatpush1.msra.mxu0 0.0
    %368 = vmatprep.subr.mxu0 0.0
    %369 = vmatpush1.msra.mxu0 0.0
    %370 = vmatprep.subr.mxu0 0.0
    %371 = vmatpush1.msra.mxu0 0.0
    %372 = vmatprep.subr.mxu0 0.0
    %373 = vmatpush1.msra.mxu0 0.0
    %374 = vmatprep.subr.mxu0 0.0
    %375 = vmatpush1.msra.mxu0 0.0
    %376 = vmatprep.subr.mxu0 0.0
    %377 = vmatpush1.msra.mxu0 0.0
    %378 = vmatprep.subr.mxu0 0.0
    %379 = vmatpush1.msra.mxu0 0.0
    %380 = vmatprep.subr.mxu0 0.0
    %381 = vmatpush1.msra.mxu0 0.0
    %382 = vmatprep.subr.mxu0 0.0
    %383 = vmatpush1.msra.mxu0 0.0
    %384 = vmatprep.subr.mxu0 0.0
    %385 = vmatpush1.msra.mxu0 0.0
    %386 = vmatprep.subr.mxu0 0.0
    %387 = vmatpush1.msra.mxu0 0.0
    %388 = vmatprep.subr.mxu0 0.0
    %389 = vmatpush1.msra.mxu0 0.0
    %390 = vmatprep.subr.mxu0 0.0
    %391 = vmatpush1.msra.mxu0 0.0
    %392 = vmatprep.subr.mxu0 0.0
    %393 = vmatpush1.msra.mxu0 0.0
    %394 = vmatprep.subr.mxu0 0.0
    %395 = vmatpush1.msra.mxu0 0.0
    %396 = vmatprep.subr.mxu0 0.0
    %397 = vmatpush1.msra.mxu0 0.0
    %398 = vmatprep.subr.mxu0 0.0
    %399 = vmatpush1.msra.mxu0 0.0
    %400 = vmatprep.subr.mxu0 0.0
    %401 = vmatpush1.msra.mxu0 0.0
    %402 = vmatprep.subr.mxu0 0.0
    %403 = vmatpush1.msra.mxu0 0.0
    %404 = vmatprep.subr.mxu0 0.0
    %405 = vmatpush1.msra.mxu0 0.0
    %406 = vmatprep.subr.mxu0 0.0
    %407 = vmatpush1.msra.mxu0 0.0
    %408 = vmatprep.subr.mxu0 0.0
    %409 = vmatpush1.msra.mxu0 0.0
    %410 = vmatprep.subr.mxu0 0.0
    %411 = vmatpush1.msra.mxu0 0.0
    %412 = vmatprep.subr.mxu0 0.0
    %413 = vmatpush1.msra.mxu0 0.0
    %414 = vmatprep.subr.mxu0 0.0
    %415 = vmatpush1.msra.mxu0 0.0
    %416 = vmatprep.subr.mxu0 0.0
    %417 = vmatpush1.msra.mxu0 0.0
    %418 = vmatprep.mubr.f32.mxu0 0.0
    %v419 = vand.u32 %v33, 4294901760
    %420 = vmatmul.mubr.f32.gmra.mrb[0].mxu0 %v419
    %v421 = vpop.f32.mrb[0].mxu0
    %v422 = vadd.f32 %v345, %v421
    %v423 = vpop.f32.mrb[0].mxu0
    %424 = vdwg.mxu0
    %425 = vmatprep.subr.mxu0 0.0
    %v426 = vand.u32 %v22, 4294901760
    %427 = vmatpush1.msra.mxu0 %v426
    %428 = vmatprep.subr.mxu0 0.0
    %v429 = vand.u32 %v37, 4294901760
    %430 = vmatpush1.msra.mxu0 %v429
    %431 = vmatprep.subr.mxu0 0.0
    %432 = vmatpush1.msra.mxu0 0.0
    %433 = vmatprep.subr.mxu0 0.0
    %434 = vmatpush1.msra.mxu0 0.0
    %435 = vmatprep.subr.mxu0 0.0
    %436 = vmatpush1.msra.mxu0 0.0
    %437 = vmatprep.subr.mxu0 0.0
    %438 = vmatpush1.msra.mxu0 0.0
    %439 = vmatprep.subr.mxu0 0.0
    %440 = vmatpush1.msra.mxu0 0.0
    %441 = vmatprep.subr.mxu0 0.0
    %442 = vmatpush1.msra.mxu0 0.0
    %443 = vmatprep.subr.mxu0 0.0
    %444 = vmatpush1.msra.mxu0 0.0
    %445 = vmatprep.subr.mxu0 0.0
    %446 = vmatpush1.msra.mxu0 0.0
    %447 = vmatprep.subr.mxu0 0.0
    %448 = vmatpush1.msra.mxu0 0.0
    %449 = vmatprep.subr.mxu0 0.0
    %450 = vmatpush1.msra.mxu0 0.0
    %451 = vmatprep.subr.mxu0 0.0
    %452 = vmatpush1.msra.mxu0 0.0
    %453 = vmatprep.subr.mxu0 0.0
    %454 = vmatpush1.msra.mxu0 0.0
    %455 = vmatprep.subr.mxu0 0.0
    %456 = vmatpush1.msra.mxu0 0.0
    %457 = vmatprep.subr.mxu0 0.0
    %458 = vmatpush1.msra.mxu0 0.0
    %459 = vmatprep.subr.mxu0 0.0
    %460 = vmatpush1.msra.mxu0 0.0
    %461 = vmatprep.subr.mxu0 0.0
    %462 = vmatpush1.msra.mxu0 0.0
    %463 = vmatprep.subr.mxu0 0.0
    %464 = vmatpush1.msra.mxu0 0.0
    %465 = vmatprep.subr.mxu0 0.0
    %466 = vmatpush1.msra.mxu0 0.0
    %467 = vmatprep.subr.mxu0 0.0
    %468 = vmatpush1.msra.mxu0 0.0
    %469 = vmatprep.subr.mxu0 0.0
    %470 = vmatpush1.msra.mxu0 0.0
    %471 = vmatprep.subr.mxu0 0.0
    %472 = vmatpush1.msra.mxu0 0.0
    %473 = vmatprep.subr.mxu0 0.0
    %474 = vmatpush1.msra.mxu0 0.0
    %475 = vmatprep.subr.mxu0 0.0
    %476 = vmatpush1.msra.mxu0 0.0
    %477 = vmatprep.subr.mxu0 0.0
    %478 = vmatpush1.msra.mxu0 0.0
    %479 = vmatprep.subr.mxu0 0.0
    %480 = vmatpush1.msra.mxu0 0.0
    %481 = vmatprep.subr.mxu0 0.0
    %482 = vmatpush1.msra.mxu0 0.0
    %483 = vmatprep.subr.mxu0 0.0
    %484 = vmatpush1.msra.mxu0 0.0
    %485 = vmatprep.subr.mxu0 0.0
    %486 = vmatpush1.msra.mxu0 0.0
    %487 = vmatprep.subr.mxu0 0.0
    %488 = vmatpush1.msra.mxu0 0.0
    %489 = vmatprep.subr.mxu0 0.0
    %490 = vmatpush1.msra.mxu0 0.0
    %491 = vmatprep.mubr.f32.mxu0 0.0
    %v492 = vand.u32 %v33, 4294901760
    %493 = vmatmul.mubr.f32.gmra.mrb[0].mxu0 %v492
    %v494 = vpop.f32.mrb[0].mxu0
    %v495 = vadd.f32 %v422, %v494
    %v496 = vpop.f32.mrb[0].mxu0
    %497 = vdwg.mxu0
    %v498 = vmax.f32 %v495, 0.0
    %v499 = vld [vmem:[%s3] sm:$0xff]
    %v500 = vld [vmem:[%s3 + $0x8] sm:$0x7f]
    %v501 = vld [vmem:[%s4] sm:$0x1]
    %v503 = vlaneseq
    %v504 = vshrl.u32 %v503, 7
    %v505 = vsub.s32 0, %v504
    %v506 = vrot.slane %v501, %v505
    %vm508 = vcmask 121856
    %v510 = vsel %vm508, %v498, 0
    %vm512 = vcmask 1046528
    %v514 = vsel %vm512, %v500, 0
    %516 = vmatprep.subr.mxu0 0.0
    %v517 = vand.u32 %v499, 4294901760
    %518 = vmatpush1.msra.mxu0 %v517
    %519 = vmatprep.subr.mxu0 0.0
    %v520 = vand.u32 %v514, 4294901760
    %521 = vmatpush1.msra.mxu0 %v520
    %522 = vmatprep.subr.mxu0 0.0
    %523 = vmatpush1.msra.mxu0 0.0
    %524 = vmatprep.subr.mxu0 0.0
    %525 = vmatpush1.msra.mxu0 0.0
    %526 = vmatprep.subr.mxu0 0.0
    %527 = vmatpush1.msra.mxu0 0.0
    %528 = vmatprep.subr.mxu0 0.0
    %529 = vmatpush1.msra.mxu0 0.0
    %530 = vmatprep.subr.mxu0 0.0
    %531 = vmatpush1.msra.mxu0 0.0
    %532 = vmatprep.subr.mxu0 0.0
    %533 = vmatpush1.msra.mxu0 0.0
    %534 = vmatprep.subr.mxu0 0.0
    %535 = vmatpush1.msra.mxu0 0.0
    %536 = vmatprep.subr.mxu0 0.0
    %537 = vmatpush1.msra.mxu0 0.0
    %538 = vmatprep.subr.mxu0 0.0
    %539 = vmatpush1.msra.mxu0 0.0
    %540 = vmatprep.subr.mxu0 0.0
    %541 = vmatpush1.msra.mxu0 0.0
    %542 = vmatprep.subr.mxu0 0.0
    %543 = vmatpush1.msra.mxu0 0.0
    %544 = vmatprep.subr.mxu0 0.0
    %545 = vmatpush1.msra.mxu0 0.0
    %546 = vmatprep.subr.mxu0 0.0
    %547 = vmatpush1.msra.mxu0 0.0
    %548 = vmatprep.subr.mxu0 0.0
    %549 = vmatpush1.msra.mxu0 0.0
    %550 = vmatprep.subr.mxu0 0.0
    %551 = vmatpush1.msra.mxu0 0.0
    %552 = vmatprep.subr.mxu0 0.0
    %553 = vmatpush1.msra.mxu0 0.0
    %554 = vmatprep.subr.mxu0 0.0
    %555 = vmatpush1.msra.mxu0 0.0
    %556 = vmatprep.subr.mxu0 0.0
    %557 = vmatpush1.msra.mxu0 0.0
    %558 = vmatprep.subr.mxu0 0.0
    %559 = vmatpush1.msra.mxu0 0.0
    %560 = vmatprep.subr.mxu0 0.0
    %561 = vmatpush1.msra.mxu0 0.0
    %562 = vmatprep.subr.mxu0 0.0
    %563 = vmatpush1.msra.mxu0 0.0
    %564 = vmatprep.subr.mxu0 0.0
    %565 = vmatpush1.msra.mxu0 0.0
    %566 = vmatprep.subr.mxu0 0.0
    %567 = vmatpush1.msra.mxu0 0.0
    %568 = vmatprep.subr.mxu0 0.0
    %569 = vmatpush1.msra.mxu0 0.0
    %570 = vmatprep.subr.mxu0 0.0
    %571 = vmatpush1.msra.mxu0 0.0
    %572 = vmatprep.subr.mxu0 0.0
    %573 = vmatpush1.msra.mxu0 0.0
    %574 = vmatprep.subr.mxu0 0.0
    %575 = vmatpush1.msra.mxu0 0.0
    %576 = vmatprep.subr.mxu0 0.0
    %577 = vmatpush1.msra.mxu0 0.0
    %578 = vmatprep.subr.mxu0 0.0
    %579 = vmatpush1.msra.mxu0 0.0
    %580 = vmatprep.subr.mxu0 0.0
    %581 = vmatpush1.msra.mxu0 0.0
    %582 = vmatprep.mubr.f32.mxu0 0.0
    %v583 = vand.u32 %v510, 4294901760
    %v584 = vsub.f32 %v510, %v583
    %v585 = vand.u32 %v584, 4294901760
    %v586 = vsub.f32 %v584, %v585
    %v587 = vand.u32 %v586, 4294901760
    %588 = vmatmul.mubr.f32.gmra.mrb[0].mxu0 %v587
    %v589 = vpop.f32.mrb[0].mxu0
    %v590 = vadd.f32 %v506, %v589
    %v591 = vpop.f32.mrb[0].mxu0
    %592 = vdwg.mxu0
    %593 = vmatprep.subr.mxu0 0.0
    %v594 = vand.u32 %v499, 4294901760
    %v595 = vsub.f32 %v499, %v594
    %v596 = vand.u32 %v595, 4294901760
    %v597 = vsub.f32 %v595, %v596
    %v598 = vand.u32 %v597, 4294901760
    %599 = vmatpush1.msra.mxu0 %v598
    %600 = vmatprep.subr.mxu0 0.0
    %v601 = vand.u32 %v514, 4294901760
    %v602 = vsub.f32 %v514, %v601
    %v603 = vand.u32 %v602, 4294901760
    %v604 = vsub.f32 %v602, %v603
    %v605 = vand.u32 %v604, 4294901760
    %606 = vmatpush1.msra.mxu0 %v605
    %607 = vmatprep.subr.mxu0 0.0
    %608 = vmatpush1.msra.mxu0 0.0
    %609 = vmatprep.subr.mxu0 0.0
    %610 = vmatpush1.msra.mxu0 0.0
    %611 = vmatprep.subr.mxu0 0.0
    %612 = vmatpush1.msra.mxu0 0.0
    %613 = vmatprep.subr.mxu0 0.0
    %614 = vmatpush1.msra.mxu0 0.0
    %615 = vmatprep.subr.mxu0 0.0
    %616 = vmatpush1.msra.mxu0 0.0
    %617 = vmatprep.subr.mxu0 0.0
    %618 = vmatpush1.msra.mxu0 0.0
    %619 = vmatprep.subr.mxu0 0.0
    %620 = vmatpush1.msra.mxu0 0.0
    %621 = vmatprep.subr.mxu0 0.0
    %622 = vmatpush1.msra.mxu0 0.0
    %623 = vmatprep.subr.mxu0 0.0
    %624 = vmatpush1.msra.mxu0 0.0
    %625 = vmatprep.subr.mxu0 0.0
    %626 = vmatpush1.msra.mxu0 0.0
    %627 = vmatprep.subr.mxu0 0.0
    %628 = vmatpush1.msra.mxu0 0.0
    %629 = vmatprep.subr.mxu0 0.0
    %630 = vmatpush1.msra.mxu0 0.0
    %631 = vmatprep.subr.mxu0 0.0
    %632 = vmatpush1.msra.mxu0 0.0
    %633 = vmatprep.subr.mxu0 0.0
    %634 = vmatpush1.msra.mxu0 0.0
    %635 = vmatprep.subr.mxu0 0.0
    %636 = vmatpush1.msra.mxu0 0.0
    %637 = vmatprep.subr.mxu0 0.0
    %638 = vmatpush1.msra.mxu0 0.0
    %639 = vmatprep.subr.mxu0 0.0
    %640 = vmatpush1.msra.mxu0 0.0
    %641 = vmatprep.subr.mxu0 0.0
    %642 = vmatpush1.msra.mxu0 0.0
    %643 = vmatprep.subr.mxu0 0.0
    %644 = vmatpush1.msra.mxu0 0.0
    %645 = vmatprep.subr.mxu0 0.0
    %646 = vmatpush1.msra.mxu0 0.0
    %647 = vmatprep.subr.mxu0 0.0
    %648 = vmatpush1.msra.mxu0 0.0
    %649 = vmatprep.subr.mxu0 0.0
    %650 = vmatpush1.msra.mxu0 0.0
    %651 = vmatprep.subr.mxu0 0.0
    %652 = vmatpush1.msra.mxu0 0.0
    %653 = vmatprep.subr.mxu0 0.0
    %654 = vmatpush1.msra.mxu0 0.0
    %655 = vmatprep.subr.mxu0 0.0
    %656 = vmatpush1.msra.mxu0 0.0
    %657 = vmatprep.subr.mxu0 0.0
    %658 = vmatpush1.msra.mxu0 0.0
    %659 = vmatprep.subr.mxu0 0.0
    %660 = vmatpush1.msra.mxu0 0.0
    %661 = vmatprep.subr.mxu0 0.0
    %662 = vmatpush1.msra.mxu0 0.0
    %663 = vmatprep.subr.mxu0 0.0
    %664 = vmatpush1.msra.mxu0 0.0
    %665 = vmatprep.subr.mxu0 0.0
    %666 = vmatpush1.msra.mxu0 0.0
    %667 = vmatprep.mubr.f32.mxu0 0.0
    %v668 = vand.u32 %v510, 4294901760
    %669 = vmatmul.mubr.f32.gmra.mrb[0].mxu0 %v668
    %v670 = vpop.f32.mrb[0].mxu0
    %v671 = vadd.f32 %v590, %v670
    %v672 = vpop.f32.mrb[0].mxu0
    %673 = vdwg.mxu0
    %674 = vmatprep.subr.mxu0 0.0
    %v675 = vand.u32 %v499, 4294901760
    %v676 = vsub.f32 %v499, %v675
    %677 = vmatpush1.msra.mxu0 %v676
    %678 = vmatprep.subr.mxu0 0.0
    %v679 = vand.u32 %v514, 4294901760
    %v680 = vsub.f32 %v514, %v679
    %681 = vmatpush1.msra.mxu0 %v680
    %682 = vmatprep.subr.mxu0 0.0
    %683 = vmatpush1.msra.mxu0 0.0
    %684 = vmatprep.subr.mxu0 0.0
    %685 = vmatpush1.msra.mxu0 0.0
    %686 = vmatprep.subr.mxu0 0.0
    %687 = vmatpush1.msra.mxu0 0.0
    %688 = vmatprep.subr.mxu0 0.0
    %689 = vmatpush1.msra.mxu0 0.0
    %690 = vmatprep.subr.mxu0 0.0
    %691 = vmatpush1.msra.mxu0 0.0
    %692 = vmatprep.subr.mxu0 0.0
    %693 = vmatpush1.msra.mxu0 0.0
    %694 = vmatprep.subr.mxu0 0.0
    %695 = vmatpush1.msra.mxu0 0.0
    %696 = vmatprep.subr.mxu0 0.0
    %697 = vmatpush1.msra.mxu0 0.0
    %698 = vmatprep.subr.mxu0 0.0
    %699 = vmatpush1.msra.mxu0 0.0
    %700 = vmatprep.subr.mxu0 0.0
    %701 = vmatpush1.msra.mxu0 0.0
    %702 = vmatprep.subr.mxu0 0.0
    %703 = vmatpush1.msra.mxu0 0.0
    %704 = vmatprep.subr.mxu0 0.0
    %705 = vmatpush1.msra.mxu0 0.0
    %706 = vmatprep.subr.mxu0 0.0
    %707 = vmatpush1.msra.mxu0 0.0
    %708 = vmatprep.subr.mxu0 0.0
    %709 = vmatpush1.msra.mxu0 0.0
    %710 = vmatprep.subr.mxu0 0.0
    %711 = vmatpush1.msra.mxu0 0.0
    %712 = vmatprep.subr.mxu0 0.0
    %713 = vmatpush1.msra.mxu0 0.0
    %714 = vmatprep.subr.mxu0 0.0
    %715 = vmatpush1.msra.mxu0 0.0
    %716 = vmatprep.subr.mxu0 0.0
    %717 = vmatpush1.msra.mxu0 0.0
    %718 = vmatprep.subr.mxu0 0.0
    %719 = vmatpush1.msra.mxu0 0.0
    %720 = vmatprep.subr.mxu0 0.0
    %721 = vmatpush1.msra.mxu0 0.0
    %722 = vmatprep.subr.mxu0 0.0
    %723 = vmatpush1.msra.mxu0 0.0
    %724 = vmatprep.subr.mxu0 0.0
    %725 = vmatpush1.msra.mxu0 0.0
    %726 = vmatprep.subr.mxu0 0.0
    %727 = vmatpush1.msra.mxu0 0.0
    %728 = vmatprep.subr.mxu0 0.0
    %729 = vmatpush1.msra.mxu0 0.0
    %730 = vmatprep.subr.mxu0 0.0
    %731 = vmatpush1.msra.mxu0 0.0
    %732 = vmatprep.subr.mxu0 0.0
    %733 = vmatpush1.msra.mxu0 0.0
    %734 = vmatprep.subr.mxu0 0.0
    %735 = vmatpush1.msra.mxu0 0.0
    %736 = vmatprep.subr.mxu0 0.0
    %737 = vmatpush1.msra.mxu0 0.0
    %738 = vmatprep.subr.mxu0 0.0
    %739 = vmatpush1.msra.mxu0 0.0
    %740 = vmatprep.subr.mxu0 0.0
    %741 = vmatpush1.msra.mxu0 0.0
    %742 = vmatprep.mubr.f32.mxu0 0.0
    %v743 = vand.u32 %v510, 4294901760
    %v744 = vsub.f32 %v510, %v743
    %745 = vmatmul.mubr.f32.gmra.mrb[0].mxu0 %v744
    %v746 = vpop.f32.mrb[0].mxu0
    %v747 = vadd.f32 %v671, %v746
    %v748 = vpop.f32.mrb[0].mxu0
    %749 = vdwg.mxu0
    %750 = vmatprep.subr.mxu0 0.0
    %v751 = vand.u32 %v499, 4294901760
    %752 = vmatpush1.msra.mxu0 %v751
    %753 = vmatprep.subr.mxu0 0.0
    %v754 = vand.u32 %v514, 4294901760
    %755 = vmatpush1.msra.mxu0 %v754
    %756 = vmatprep.subr.mxu0 0.0
    %757 = vmatpush1.msra.mxu0 0.0
    %758 = vmatprep.subr.mxu0 0.0
    %759 = vmatpush1.msra.mxu0 0.0
    %760 = vmatprep.subr.mxu0 0.0
    %761 = vmatpush1.msra.mxu0 0.0
    %762 = vmatprep.subr.mxu0 0.0
    %763 = vmatpush1.msra.mxu0 0.0
    %764 = vmatprep.subr.mxu0 0.0
    %765 = vmatpush1.msra.mxu0 0.0
    %766 = vmatprep.subr.mxu0 0.0
    %767 = vmatpush1.msra.mxu0 0.0
    %768 = vmatprep.subr.mxu0 0.0
    %769 = vmatpush1.msra.mxu0 0.0
    %770 = vmatprep.subr.mxu0 0.0
    %771 = vmatpush1.msra.mxu0 0.0
    %772 = vmatprep.subr.mxu0 0.0
    %773 = vmatpush1.msra.mxu0 0.0
    %774 = vmatprep.subr.mxu0 0.0
    %775 = vmatpush1.msra.mxu0 0.0
    %776 = vmatprep.subr.mxu0 0.0
    %777 = vmatpush1.msra.mxu0 0.0
    %778 = vmatprep.subr.mxu0 0.0
    %779 = vmatpush1.msra.mxu0 0.0
    %780 = vmatprep.subr.mxu0 0.0
    %781 = vmatpush1.msra.mxu0 0.0
    %782 = vmatprep.subr.mxu0 0.0
    %783 = vmatpush1.msra.mxu0 0.0
    %784 = vmatprep.subr.mxu0 0.0
    %785 = vmatpush1.msra.mxu0 0.0
    %786 = vmatprep.subr.mxu0 0.0
    %787 = vmatpush1.msra.mxu0 0.0
    %788 = vmatprep.subr.mxu0 0.0
    %789 = vmatpush1.msra.mxu0 0.0
    %790 = vmatprep.subr.mxu0 0.0
    %791 = vmatpush1.msra.mxu0 0.0
    %792 = vmatprep.subr.mxu0 0.0
    %793 = vmatpush1.msra.mxu0 0.0
    %794 = vmatprep.subr.mxu0 0.0
    %795 = vmatpush1.msra.mxu0 0.0
    %796 = vmatprep.subr.mxu0 0.0
    %797 = vmatpush1.msra.mxu0 0.0
    %798 = vmatprep.subr.mxu0 0.0
    %799 = vmatpush1.msra.mxu0 0.0
    %800 = vmatprep.subr.mxu0 0.0
    %801 = vmatpush1.msra.mxu0 0.0
    %802 = vmatprep.subr.mxu0 0.0
    %803 = vmatpush1.msra.mxu0 0.0
    %804 = vmatprep.subr.mxu0 0.0
    %805 = vmatpush1.msra.mxu0 0.0
    %806 = vmatprep.subr.mxu0 0.0
    %807 = vmatpush1.msra.mxu0 0.0
    %808 = vmatprep.subr.mxu0 0.0
    %809 = vmatpush1.msra.mxu0 0.0
    %810 = vmatprep.subr.mxu0 0.0
    %811 = vmatpush1.msra.mxu0 0.0
    %812 = vmatprep.subr.mxu0 0.0
    %813 = vmatpush1.msra.mxu0 0.0
    %814 = vmatprep.subr.mxu0 0.0
    %815 = vmatpush1.msra.mxu0 0.0
    %816 = vmatprep.mubr.f32.mxu0 0.0
    %v817 = vand.u32 %v510, 4294901760
    %v818 = vsub.f32 %v510, %v817
    %v819 = vand.u32 %v818, 4294901760
    %820 = vmatmul.mubr.f32.gmra.mrb[0].mxu0 %v819
    %v821 = vpop.f32.mrb[0].mxu0
    %v822 = vadd.f32 %v747, %v821
    %v823 = vpop.f32.mrb[0].mxu0
    %824 = vdwg.mxu0
    %825 = vmatprep.subr.mxu0 0.0
    %v826 = vand.u32 %v499, 4294901760
    %v827 = vsub.f32 %v499, %v826
    %v828 = vand.u32 %v827, 4294901760
    %829 = vmatpush1.msra.mxu0 %v828
    %830 = vmatprep.subr.mxu0 0.0
    %v831 = vand.u32 %v514, 4294901760
    %v832 = vsub.f32 %v514, %v831
    %v833 = vand.u32 %v832, 4294901760
    %834 = vmatpush1.msra.mxu0 %v833
    %835 = vmatprep.subr.mxu0 0.0
    %836 = vmatpush1.msra.mxu0 0.0
    %837 = vmatprep.subr.mxu0 0.0
    %838 = vmatpush1.msra.mxu0 0.0
    %839 = vmatprep.subr.mxu0 0.0
    %840 = vmatpush1.msra.mxu0 0.0
    %841 = vmatprep.subr.mxu0 0.0
    %842 = vmatpush1.msra.mxu0 0.0
    %843 = vmatprep.subr.mxu0 0.0
    %844 = vmatpush1.msra.mxu0 0.0
    %845 = vmatprep.subr.mxu0 0.0
    %846 = vmatpush1.msra.mxu0 0.0
    %847 = vmatprep.subr.mxu0 0.0
    %848 = vmatpush1.msra.mxu0 0.0
    %849 = vmatprep.subr.mxu0 0.0
    %850 = vmatpush1.msra.mxu0 0.0
    %851 = vmatprep.subr.mxu0 0.0
    %852 = vmatpush1.msra.mxu0 0.0
    %853 = vmatprep.subr.mxu0 0.0
    %854 = vmatpush1.msra.mxu0 0.0
    %855 = vmatprep.subr.mxu0 0.0
    %856 = vmatpush1.msra.mxu0 0.0
    %857 = vmatprep.subr.mxu0 0.0
    %858 = vmatpush1.msra.mxu0 0.0
    %859 = vmatprep.subr.mxu0 0.0
    %860 = vmatpush1.msra.mxu0 0.0
    %861 = vmatprep.subr.mxu0 0.0
    %862 = vmatpush1.msra.mxu0 0.0
    %863 = vmatprep.subr.mxu0 0.0
    %864 = vmatpush1.msra.mxu0 0.0
    %865 = vmatprep.subr.mxu0 0.0
    %866 = vmatpush1.msra.mxu0 0.0
    %867 = vmatprep.subr.mxu0 0.0
    %868 = vmatpush1.msra.mxu0 0.0
    %869 = vmatprep.subr.mxu0 0.0
    %870 = vmatpush1.msra.mxu0 0.0
    %871 = vmatprep.subr.mxu0 0.0
    %872 = vmatpush1.msra.mxu0 0.0
    %873 = vmatprep.subr.mxu0 0.0
    %874 = vmatpush1.msra.mxu0 0.0
    %875 = vmatprep.subr.mxu0 0.0
    %876 = vmatpush1.msra.mxu0 0.0
    %877 = vmatprep.subr.mxu0 0.0
    %878 = vmatpush1.msra.mxu0 0.0
    %879 = vmatprep.subr.mxu0 0.0
    %880 = vmatpush1.msra.mxu0 0.0
    %881 = vmatprep.subr.mxu0 0.0
    %882 = vmatpush1.msra.mxu0 0.0
    %883 = vmatprep.subr.mxu0 0.0
    %884 = vmatpush1.msra.mxu0 0.0
    %885 = vmatprep.subr.mxu0 0.0
    %886 = vmatpush1.msra.mxu0 0.0
    %887 = vmatprep.subr.mxu0 0.0
    %888 = vmatpush1.msra.mxu0 0.0
    %889 = vmatprep.subr.mxu0 0.0
    %890 = vmatpush1.msra.mxu0 0.0
    %891 = vmatprep.subr.mxu0 0.0
    %892 = vmatpush1.msra.mxu0 0.0
    %893 = vmatprep.subr.mxu0 0.0
    %894 = vmatpush1.msra.mxu0 0.0
    %895 = vmatprep.mubr.f32.mxu0 0.0
    %v896 = vand.u32 %v510, 4294901760
    %897 = vmatmul.mubr.f32.gmra.mrb[0].mxu0 %v896
    %v898 = vpop.f32.mrb[0].mxu0
    %v899 = vadd.f32 %v822, %v898
    %v900 = vpop.f32.mrb[0].mxu0
    %901 = vdwg.mxu0
    %902 = vmatprep.subr.mxu0 0.0
    %v903 = vand.u32 %v499, 4294901760
    %904 = vmatpush1.msra.mxu0 %v903
    %905 = vmatprep.subr.mxu0 0.0
    %v906 = vand.u32 %v514, 4294901760
    %907 = vmatpush1.msra.mxu0 %v906
    %908 = vmatprep.subr.mxu0 0.0
    %909 = vmatpush1.msra.mxu0 0.0
    %910 = vmatprep.subr.mxu0 0.0
    %911 = vmatpush1.msra.mxu0 0.0
    %912 = vmatprep.subr.mxu0 0.0
    %913 = vmatpush1.msra.mxu0 0.0
    %914 = vmatprep.subr.mxu0 0.0
    %915 = vmatpush1.msra.mxu0 0.0
    %916 = vmatprep.subr.mxu0 0.0
    %917 = vmatpush1.msra.mxu0 0.0
    %918 = vmatprep.subr.mxu0 0.0
    %919 = vmatpush1.msra.mxu0 0.0
    %920 = vmatprep.subr.mxu0 0.0
    %921 = vmatpush1.msra.mxu0 0.0
    %922 = vmatprep.subr.mxu0 0.0
    %923 = vmatpush1.msra.mxu0 0.0
    %924 = vmatprep.subr.mxu0 0.0
    %925 = vmatpush1.msra.mxu0 0.0
    %926 = vmatprep.subr.mxu0 0.0
    %927 = vmatpush1.msra.mxu0 0.0
    %928 = vmatprep.subr.mxu0 0.0
    %929 = vmatpush1.msra.mxu0 0.0
    %930 = vmatprep.subr.mxu0 0.0
    %931 = vmatpush1.msra.mxu0 0.0
    %932 = vmatprep.subr.mxu0 0.0
    %933 = vmatpush1.msra.mxu0 0.0
    %934 = vmatprep.subr.mxu0 0.0
    %935 = vmatpush1.msra.mxu0 0.0
    %936 = vmatprep.subr.mxu0 0.0
    %937 = vmatpush1.msra.mxu0 0.0
    %938 = vmatprep.subr.mxu0 0.0
    %939 = vmatpush1.msra.mxu0 0.0
    %940 = vmatprep.subr.mxu0 0.0
    %941 = vmatpush1.msra.mxu0 0.0
    %942 = vmatprep.subr.mxu0 0.0
    %943 = vmatpush1.msra.mxu0 0.0
    %944 = vmatprep.subr.mxu0 0.0
    %945 = vmatpush1.msra.mxu0 0.0
    %946 = vmatprep.subr.mxu0 0.0
    %947 = vmatpush1.msra.mxu0 0.0
    %948 = vmatprep.subr.mxu0 0.0
    %949 = vmatpush1.msra.mxu0 0.0
    %950 = vmatprep.subr.mxu0 0.0
    %951 = vmatpush1.msra.mxu0 0.0
    %952 = vmatprep.subr.mxu0 0.0
    %953 = vmatpush1.msra.mxu0 0.0
    %954 = vmatprep.subr.mxu0 0.0
    %955 = vmatpush1.msra.mxu0 0.0
    %956 = vmatprep.subr.mxu0 0.0
    %957 = vmatpush1.msra.mxu0 0.0
    %958 = vmatprep.subr.mxu0 0.0
    %959 = vmatpush1.msra.mxu0 0.0
    %960 = vmatprep.subr.mxu0 0.0
    %961 = vmatpush1.msra.mxu0 0.0
    %962 = vmatprep.subr.mxu0 0.0
    %963 = vmatpush1.msra.mxu0 0.0
    %964 = vmatprep.subr.mxu0 0.0
    %965 = vmatpush1.msra.mxu0 0.0
    %966 = vmatprep.subr.mxu0 0.0
    %967 = vmatpush1.msra.mxu0 0.0
    %968 = vmatprep.mubr.f32.mxu0 0.0
    %v969 = vand.u32 %v510, 4294901760
    %970 = vmatmul.mubr.f32.gmra.mrb[0].mxu0 %v969
    %v971 = vpop.f32.mrb[0].mxu0
    %v972 = vadd.f32 %v899, %v971
    %v973 = vpop.f32.mrb[0].mxu0
    %974 = vdwg.mxu0
    %vm975 = vcmask 39936
    %976 = vst.msk [vmem:[#allocation2] sm:$0xff] %vm975, %v972
    // Predicated region
    $region22: #{tpu_custom_call.1} parent=1 // pred_check
      _
    $region23: #{tpu_custom_call.1} parent=1 // pred_check_branch
      %978 = sbr.rel (0) target = $region25
    $region24: #{tpu_custom_call.1} parent=1 // pred_region
      %s980 = ssub.s32 128, 128
      %981 = vsyncadd [#allocation3], %s980
      %s983 = sshll.u32 [#allocation2], 4
      %s984 = int_to_ptr.vmem [resolvable:$true] %s983
      %986 = dma.vmem_to_hbm [thread:$0]  %s984, 128, %s5, [#allocation3]
    $region25: #{tpu_custom_call.1} parent=1 // pred_fallthru
      _
    // Predicated region
    $region26: #{tpu_custom_call.1} parent=1 // pred_check
      _
    $region27: #{tpu_custom_call.1} parent=1 // pred_check_branch
      %988 = sbr.rel (0) target = $region29
    $region28: #{tpu_custom_call.1} parent=1 // pred_region
      %989 = dma.done [#allocation3], 128
    $region29: #{tpu_custom_call.1} parent=1 // pred_fallthru
      _
    %990 = vsyncpa [#allocation3], 1

</llo_original>
